<compile_context>
chip_gen: v5e
topology: v5e:2x2
jax: 0.10.0
libtpu: 0.0.40
codegen_flags: <defaults>
</compile_context>

<pallas_src>
import functools

import jax
import jax.numpy as jnp
import numpy as np
from jax.experimental import pallas as pl
from jax.experimental.pallas import tpu as pltpu


def _round_up(x, m):
    return (x + m - 1) // m * m


def _codebook_kernel(x_ref, wq_ref, bq_ref, cb_ref, cbT_ref, csq_ref,
                     wp_ref, bp_ref, out_ref, idx_ref, loss_ref,
                     *, beta, head_num, latent_dim, inv_num_codebooks):
    """One grid step == one tile of TM token rows (all heads fused inside).

    x_ref   : (TM, Din)      f32       input tokens for this tile
    wq_ref  : (Din, H*L)     f32/bf16  fused quant_act weight
    bq_ref  : (1, H*L)       f32       fused quant_act bias
    cb_ref  : (H, K, L)      f32       raw codebooks (gather / loss)
    cbT_ref : (H, L, K)      f32       (optionally l2-normalized) codebooks, transposed
    csq_ref : (H, 1, K)      f32       squared row norms of the (normalized) codebooks
    wp_ref  : (H*L, Dout)    f32/bf16  fused post_quant weight
    bp_ref  : (1, Dout)      f32       post_quant bias
    out_ref : (TM, Dout)     f32       post_quant output tile
    idx_ref : (TM, H)        i32       argmin codebook indices (one column per head)
    loss_ref: (TM, 1)        f32       per-token VQ loss (averaged over codebooks)
    """
    TM = x_ref.shape[0]
    K = cb_ref.shape[1]
    L = latent_dim

    x = x_ref[...]
    # Fused quant_act over all heads, f32 accumulation on the MXU.
    z_all = (jnp.dot(x.astype(wq_ref.dtype), wq_ref[...],
                     preferred_element_type=jnp.float32)
             + bq_ref[...])                                     # (TM, H*L)

    loss_acc = jnp.zeros((TM, 1), jnp.float32)
    lane_iota = jax.lax.broadcasted_iota(jnp.int32, (TM, K), 1)  # hoisted
    zq_cols = []
    idx_cols = []

    for h in range(head_num):                                   # static, unrolled
        z = z_all[:, h * L:(h + 1) * L]                          # (TM, L)
        # Squared-L2 distance up to the per-row constant |z|^2 (argmin-invariant):
        #   d[m, k] = |e_k|^2 - 2 * z_m . e_k
        d = csq_ref[h] - 2.0 * jnp.dot(z, cbT_ref[h],
                                       preferred_element_type=jnp.float32)  # (TM, K)
        idx = jnp.argmin(d, axis=1).astype(jnp.int32)[:, None]              # (TM, 1)
        idx_cols.append(idx)
        # Gather the selected codebook rows via a one-hot matmul (MXU-friendly).
        onehot = (lane_iota == idx).astype(jnp.float32)                     # (TM, K)
        z_q = jnp.dot(onehot, cb_ref[h],
                      preferred_element_type=jnp.float32)                   # (TM, L)
        # encoder loss + beta * codebook loss share the same forward value.
        diff = z_q - z
        sq = jnp.mean(diff * diff, axis=-1, keepdims=True)                  # (TM, 1)
        loss_acc = loss_acc + sq * (1.0 + beta)
        zq_cols.append(z_q)

    # Straight-through estimator: forward value of z + (z_q - z).detach() == z_q.
    zq_all = jnp.concatenate(zq_cols, axis=-1)                  # (TM, H*L)
    out_ref[...] = (jnp.dot(zq_all.astype(wp_ref.dtype), wp_ref[...],
                            preferred_element_type=jnp.float32)
                    + bp_ref[...]).astype(out_ref.dtype)
    idx_ref[...] = jnp.concatenate(idx_cols, axis=-1)
    loss_ref[...] = loss_acc * inv_num_codebooks


def codebook_forward(z, params, *, beta, l2norm_h, head_num,
                     seperate_codebook_per_head=True, tile_m=512,
                     matmul_dtype=jnp.float32):
    """Runs the Codebook forward pass. Returns (z_q, [indices per head], loss)."""
    wq, bq, cb, wp, bp = params
    B, N, Din = z.shape
    M = B * N
    H, L, _ = wq.shape
    K = cb.shape[1]
    Dout = wp.shape[-1]
    HL = H * L
    assert H == head_num

    # --- parameter fusion / precompute (tiny XLA ops, hoisted out of the
    #     kernel so they are not redone per (tile, head) grid step) ----------
    wq_all = jnp.transpose(wq, (2, 0, 1)).reshape(Din, HL)   # x @ wq_all == quant_act
    bq_all = bq.reshape(1, HL)
    wp_all = wp.reshape(HL, Dout)
    cb = cb.astype(jnp.float32)
    if l2norm_h:
        # Faithful to the torch code: only the codebook side is normalized for
        # the distance computation; the gather still uses the raw weights.
        norm = jnp.sqrt(jnp.sum(cb * cb, axis=-1, keepdims=True))
        emb_d = cb / jnp.maximum(norm, 1e-12)
    else:
        emb_d = cb
    cbT_d = jnp.transpose(emb_d, (0, 2, 1))                  # (H, L, K)
    csq = jnp.sum(emb_d * emb_d, axis=-1)[:, None, :]        # (H, 1, K)

    wq_all = wq_all.astype(matmul_dtype)                     # optional bf16 MXU feed
    wp_all = wp_all.astype(matmul_dtype)

    # --- tile / pad the token axis ------------------------------------------
    x = z.reshape(M, Din).astype(jnp.float32)
    TM = min(tile_m, _round_up(M, 8))
    M_pad = _round_up(M, TM)
    if M_pad != M:
        x = jnp.pad(x, ((0, M_pad - M), (0, 0)))

    num_codebooks = head_num if seperate_codebook_per_head else 1
    kernel = functools.partial(
        _codebook_kernel, beta=float(beta), head_num=head_num,
        latent_dim=L, inv_num_codebooks=1.0 / num_codebooks)

    out, idx, loss = pl.pallas_call(
        kernel,
        out_shape=(
            jax.ShapeDtypeStruct((M_pad, Dout), jnp.float32),
            jax.ShapeDtypeStruct((M_pad, head_num), jnp.int32),
            jax.ShapeDtypeStruct((M_pad, 1), jnp.float32),
        ),
        grid_spec=pltpu.PrefetchScalarGridSpec(
            num_scalar_prefetch=0,
            grid=(M_pad // TM,),
            in_specs=[
                pl.BlockSpec((TM, Din), lambda i: (i, 0)),       # x tile
                pl.BlockSpec((Din, HL), lambda i: (0, 0)),       # fused Wq
                pl.BlockSpec((1, HL), lambda i: (0, 0)),         # fused bq
                pl.BlockSpec((H, K, L), lambda i: (0, 0, 0)),    # raw codebooks
                pl.BlockSpec((H, L, K), lambda i: (0, 0, 0)),    # (norm) codebooks^T
                pl.BlockSpec((H, 1, K), lambda i: (0, 0, 0)),    # |e_k|^2 per head
                pl.BlockSpec((HL, Dout), lambda i: (0, 0)),      # fused Wp
                pl.BlockSpec((1, Dout), lambda i: (0, 0)),       # bp
            ],
            out_specs=(
                pl.BlockSpec((TM, Dout), lambda i: (i, 0)),
                pl.BlockSpec((TM, head_num), lambda i: (i, 0)),
                pl.BlockSpec((TM, 1), lambda i: (i, 0)),
            ),
        ),
        compiler_params=pltpu.CompilerParams(
            dimension_semantics=("parallel",)),
    )(x, wq_all, bq_all, cb, cbT_d, csq, wp_all, bp)

    z_q = out[:M].reshape(B, N, Dout)
    loss = loss[:M, 0].reshape(B, N)
    indices = [idx[:M, h] for h in range(head_num)]
    return z_q, indices, loss


def _reference_forward(z, params, *, beta, l2norm_h, head_num,
                       seperate_codebook_per_head=True):
    """Pure-JAX reference mirroring the PyTorch module (for a sanity check)."""
    wq, bq, cb, wp, bp = params
    B, N, Din = z.shape
    M = B * N
    x = z.reshape(M, Din).astype(jnp.float32)
    out = jnp.broadcast_to(bp, (M, bp.shape[-1]))
    loss = jnp.zeros((M,), jnp.float32)
    idx_list = []
    for h in range(head_num):
        zh = x @ wq[h].T + bq[h, 0]
        emb = cb[h]
        emb_d = emb
        if l2norm_h:
            nrm = jnp.linalg.norm(emb, axis=-1, keepdims=True)
            emb_d = emb / jnp.maximum(nrm, 1e-12)
        d = (jnp.sum(zh ** 2, 1, keepdims=True) + jnp.sum(emb_d ** 2, 1)
             - 2.0 * zh @ emb_d.T)
        idx = jnp.argmin(d, axis=1)
        idx_list.append(idx.astype(jnp.int32))
        z_q = emb[idx]
        sq = jnp.mean((z_q - zh) ** 2, -1)
        loss = loss + sq + sq * beta
        out = out + z_q @ wp[h]
    num_codebooks = head_num if seperate_codebook_per_head else 1
    loss = loss / num_codebooks
    return out.reshape(B, N, -1), idx_list, loss.reshape(B, N)


if __name__ == "__main__":
    # args: num_codebook_vectors=128, latent_dim=32, beta=0.25
    input_dim = 32
    latent_dim = 32
    head_num = 2
    K = 128
    out_dim = input_dim
    beta = 0.25

    key = jax.random.PRNGKey(0)
    kz, kwq, kbq, kcb, kwp, kbp = jax.random.split(key, 6)

    # deterministic parameter init (PyTorch-like uniform ranges)
    lim_q = 1.0 / np.sqrt(input_dim)
    wq = jax.random.uniform(kwq, (head_num, latent_dim, input_dim),
                            jnp.float32, -lim_q, lim_q)
    bq = jax.random.uniform(kbq, (head_num, 1, latent_dim),
                            jnp.float32, -lim_q, lim_q)
    cb = jax.random.uniform(kcb, (head_num, K, latent_dim),
                            jnp.float32, -1.0 / K, 1.0 / K)
    lim_p = 1.0 / np.sqrt(latent_dim * head_num)
    wp = jax.random.uniform(kwp, (head_num, latent_dim, out_dim),
                            jnp.float32, -lim_p, lim_p)
    bp = jax.random.uniform(kbp, (1, out_dim), jnp.float32, -lim_p, lim_p)
    params = (wq, bq, cb, wp, bp)

    def check(B, N, l2norm_h, tile_m):
        z_in = jax.random.normal(jax.random.fold_in(kz, B * 1000 + N),
                                 (B, N, input_dim), jnp.float32)
        z_q, indices, loss = codebook_forward(
            z_in, params, beta=beta, l2norm_h=l2norm_h, head_num=head_num,
            tile_m=tile_m)
        jax.block_until_ready((z_q, loss))
        z_q_r, idx_r, loss_r = _reference_forward(
            z_in, params, beta=beta, l2norm_h=l2norm_h, head_num=head_num)
        np.testing.assert_allclose(np.asarray(z_q), np.asarray(z_q_r),
                                   rtol=1e-4, atol=1e-5)
        np.testing.assert_allclose(np.asarray(loss), np.asarray(loss_r),
                                   rtol=1e-4, atol=1e-6)
        for h in range(head_num):
            np.testing.assert_array_equal(np.asarray(indices[h]),
                                          np.asarray(idx_r[h]))
        return z_in

    # multi-tile grid (M = 16 rows, tile_m = 8 -> 2 parallel grid steps)
    z_in = check(B=2, N=8, l2norm_h=False, tile_m=8)
    # ragged M (exercises the padding path) + l2norm_h distance variant
    check(B=2, N=7, l2norm_h=True, tile_m=8)

    # bf16 MXU feed for the two projections (distance matmul stays f32);
    # smoke-test only — bf16 rounding intentionally perturbs the outputs.
    z_q_bf16, _, _ = codebook_forward(
        z_in, params, beta=beta, l2norm_h=False, head_num=head_num,
        tile_m=8, matmul_dtype=jnp.bfloat16)
    jax.block_until_ready(z_q_bf16)

    print("KERNEL_OK")
</pallas_src>

<mosaic_0001>
module attributes {stable_mosaic.version = 11 : i64} {
  func.func @_codebook_kernel(%arg0: i32, %arg1: memref<8x32xf32, #tpu.memory_space<vmem>>, %arg2: memref<32x64xf32, #tpu.memory_space<vmem>>, %arg3: memref<1x64xf32, #tpu.memory_space<vmem>>, %arg4: memref<2x128x32xf32, #tpu.memory_space<vmem>>, %arg5: memref<2x32x128xf32, #tpu.memory_space<vmem>>, %arg6: memref<2x1x128xf32, #tpu.memory_space<vmem>>, %arg7: memref<64x32xf32, #tpu.memory_space<vmem>>, %arg8: memref<1x32xf32, #tpu.memory_space<vmem>>, %arg9: memref<8x32xf32, #tpu.memory_space<vmem>>, %arg10: memref<8x2xi32, #tpu.memory_space<vmem>>, %arg11: memref<8x1xf32, #tpu.memory_space<vmem>>) attributes {dimension_semantics = [#tpu.dimension_semantics<parallel>], iteration_bounds = array<i64: 2>, scalar_prefetch = 0 : i64, scratch_operands = 0 : i64, tpu.core_type = #tpu.core_type<tc>, window_params = [{transform_indices = @transform_0, window_bounds = array<i64: 8, 32>}, {pipeline_mode = #tpu.pipeline_mode<synchronous>, transform_indices = @transform_1, window_bounds = array<i64: 32, 64>}, {pipeline_mode = #tpu.pipeline_mode<synchronous>, transform_indices = @transform_2, window_bounds = array<i64: 1, 64>}, {pipeline_mode = #tpu.pipeline_mode<synchronous>, transform_indices = @transform_3, window_bounds = array<i64: 2, 128, 32>}, {pipeline_mode = #tpu.pipeline_mode<synchronous>, transform_indices = @transform_4, window_bounds = array<i64: 2, 32, 128>}, {pipeline_mode = #tpu.pipeline_mode<synchronous>, transform_indices = @transform_5, window_bounds = array<i64: 2, 1, 128>}, {pipeline_mode = #tpu.pipeline_mode<synchronous>, transform_indices = @transform_6, window_bounds = array<i64: 64, 32>}, {pipeline_mode = #tpu.pipeline_mode<synchronous>, transform_indices = @transform_7, window_bounds = array<i64: 1, 32>}, {transform_indices = @transform_8, window_bounds = array<i64: 8, 32>}, {transform_indices = @transform_9, window_bounds = array<i64: 8, 2>}, {transform_indices = @transform_10, window_bounds = array<i64: 8, 1>}]} {
    %c0 = arith.constant 0 : index
    %c0_0 = arith.constant 0 : index
    %0 = vector.load %arg1[%c0, %c0_0] : memref<8x32xf32, #tpu.memory_space<vmem>>, vector<8x32xf32>
    %c0_1 = arith.constant 0 : index
    %c0_2 = arith.constant 0 : index
    %1 = vector.load %arg2[%c0_1, %c0_2] : memref<32x64xf32, #tpu.memory_space<vmem>>, vector<32x64xf32>
    %cst = arith.constant dense<0.000000e+00> : vector<8x64xf32>
    %2 = tpu.matmul %0, %1, %cst {dimension_numbers = #tpu.dot_dimension_numbers<[1], [0], [0], [1], [0, 0, 1, 1], [], []>} : vector<8x32xf32>, vector<32x64xf32>, vector<8x64xf32> -> vector<8x64xf32>
    %c0_3 = arith.constant 0 : index
    %c0_4 = arith.constant 0 : index
    %3 = vector.load %arg3[%c0_3, %c0_4] : memref<1x64xf32, #tpu.memory_space<vmem>>, vector<1x64xf32>
    %4 = vector.broadcast %3 : vector<1x64xf32> to vector<8x64xf32>
    %5 = arith.addf %2, %4 : vector<8x64xf32>
    %cst_5 = arith.constant 0.000000e+00 : f32
    %6 = vector.broadcast %cst_5 : f32 to vector<8x1xf32>
    %7 = tpu.iota {dimensions = array<i32: 1>} : vector<8x128xi32>
    %8 = vector.extract_strided_slice %5 {offsets = [0, 0], sizes = [8, 32], strides = [1, 1]} : vector<8x64xf32> to vector<8x32xf32>
    %c0_6 = arith.constant 0 : index
    %c0_7 = arith.constant 0 : index
    %c0_8 = arith.constant 0 : index
    %9 = vector.load %arg6[%c0_6, %c0_7, %c0_8] : memref<2x1x128xf32, #tpu.memory_space<vmem>>, vector<1x1x128xf32>
    %10 = vector.shape_cast %9 : vector<1x1x128xf32> to vector<1x128xf32>
    %c0_9 = arith.constant 0 : index
    %c0_10 = arith.constant 0 : index
    %c0_11 = arith.constant 0 : index
    %11 = vector.load %arg5[%c0_9, %c0_10, %c0_11] : memref<2x32x128xf32, #tpu.memory_space<vmem>>, vector<1x32x128xf32>
    %12 = vector.shape_cast %11 : vector<1x32x128xf32> to vector<32x128xf32>
    %cst_12 = arith.constant dense<0.000000e+00> : vector<8x128xf32>
    %13 = tpu.matmul %8, %12, %cst_12 {dimension_numbers = #tpu.dot_dimension_numbers<[1], [0], [0], [1], [0, 0, 1, 1], [], []>} : vector<8x32xf32>, vector<32x128xf32>, vector<8x128xf32> -> vector<8x128xf32>
    %cst_13 = arith.constant 2.000000e+00 : f32
    %14 = vector.broadcast %cst_13 : f32 to vector<8x128xf32>
    %15 = arith.mulf %14, %13 : vector<8x128xf32>
    %16 = vector.broadcast %10 : vector<1x128xf32> to vector<8x128xf32>
    %17 = arith.subf %16, %15 : vector<8x128xf32>
    %18 = tpu.reduce_index %17 {axis = 1 : i32, kind = #tpu.reduction_kind<arg_min>} : vector<8x128xf32> -> vector<8xi32>
    %19 = vector.shape_cast %18 : vector<8xi32> to vector<8x1xi32>
    %20 = vector.broadcast %19 : vector<8x1xi32> to vector<8x128xi32>
    %21 = arith.cmpi eq, %7, %20 : vector<8x128xi32>
    %22 = arith.extui %21 : vector<8x128xi1> to vector<8x128xi32>
    %23 = arith.sitofp %22 : vector<8x128xi32> to vector<8x128xf32>
    %c0_14 = arith.constant 0 : index
    %c0_15 = arith.constant 0 : index
    %c0_16 = arith.constant 0 : index
    %24 = vector.load %arg4[%c0_14, %c0_15, %c0_16] : memref<2x128x32xf32, #tpu.memory_space<vmem>>, vector<1x128x32xf32>
    %25 = vector.shape_cast %24 : vector<1x128x32xf32> to vector<128x32xf32>
    %cst_17 = arith.constant dense<0.000000e+00> : vector<8x32xf32>
    %26 = tpu.matmul %23, %25, %cst_17 {dimension_numbers = #tpu.dot_dimension_numbers<[1], [0], [0], [1], [0, 0, 1, 1], [], []>} : vector<8x128xf32>, vector<128x32xf32>, vector<8x32xf32> -> vector<8x32xf32>
    %27 = arith.subf %26, %8 : vector<8x32xf32>
    %28 = arith.mulf %27, %27 : vector<8x32xf32>
    %cst_18 = arith.constant dense<0.000000e+00> : vector<8xf32>
    %29 = vector.multi_reduction <add>, %28, %cst_18 [1] : vector<8x32xf32> to vector<8xf32>
    %30 = vector.shape_cast %29 : vector<8xf32> to vector<8x1xf32>
    %cst_19 = arith.constant 3.200000e+01 : f32
    %31 = vector.broadcast %cst_19 : f32 to vector<8x1xf32>
    %32 = arith.divf %30, %31 : vector<8x1xf32>
    %cst_20 = arith.constant 1.250000e+00 : f32
    %33 = vector.broadcast %cst_20 : f32 to vector<8x1xf32>
    %34 = arith.mulf %32, %33 : vector<8x1xf32>
    %35 = arith.addf %6, %34 : vector<8x1xf32>
    %36 = vector.extract_strided_slice %5 {offsets = [0, 32], sizes = [8, 32], strides = [1, 1]} : vector<8x64xf32> to vector<8x32xf32>
    %c1 = arith.constant 1 : index
    %c0_21 = arith.constant 0 : index
    %c0_22 = arith.constant 0 : index
    %37 = vector.load %arg6[%c1, %c0_21, %c0_22] : memref<2x1x128xf32, #tpu.memory_space<vmem>>, vector<1x1x128xf32>
    %38 = vector.shape_cast %37 : vector<1x1x128xf32> to vector<1x128xf32>
    %c1_23 = arith.constant 1 : index
    %c0_24 = arith.constant 0 : index
    %c0_25 = arith.constant 0 : index
    %39 = vector.load %arg5[%c1_23, %c0_24, %c0_25] : memref<2x32x128xf32, #tpu.memory_space<vmem>>, vector<1x32x128xf32>
    %40 = vector.shape_cast %39 : vector<1x32x128xf32> to vector<32x128xf32>
    %cst_26 = arith.constant dense<0.000000e+00> : vector<8x128xf32>
    %41 = tpu.matmul %36, %40, %cst_26 {dimension_numbers = #tpu.dot_dimension_numbers<[1], [0], [0], [1], [0, 0, 1, 1], [], []>} : vector<8x32xf32>, vector<32x128xf32>, vector<8x128xf32> -> vector<8x128xf32>
    %cst_27 = arith.constant 2.000000e+00 : f32
    %42 = vector.broadcast %cst_27 : f32 to vector<8x128xf32>
    %43 = arith.mulf %42, %41 : vector<8x128xf32>
    %44 = vector.broadcast %38 : vector<1x128xf32> to vector<8x128xf32>
    %45 = arith.subf %44, %43 : vector<8x128xf32>
    %46 = tpu.reduce_index %45 {axis = 1 : i32, kind = #tpu.reduction_kind<arg_min>} : vector<8x128xf32> -> vector<8xi32>
    %47 = vector.shape_cast %46 : vector<8xi32> to vector<8x1xi32>
    %48 = vector.broadcast %47 : vector<8x1xi32> to vector<8x128xi32>
    %49 = arith.cmpi eq, %7, %48 : vector<8x128xi32>
    %50 = arith.extui %49 : vector<8x128xi1> to vector<8x128xi32>
    %51 = arith.sitofp %50 : vector<8x128xi32> to vector<8x128xf32>
    %c1_28 = arith.constant 1 : index
    %c0_29 = arith.constant 0 : index
    %c0_30 = arith.constant 0 : index
    %52 = vector.load %arg4[%c1_28, %c0_29, %c0_30] : memref<2x128x32xf32, #tpu.memory_space<vmem>>, vector<1x128x32xf32>
    %53 = vector.shape_cast %52 : vector<1x128x32xf32> to vector<128x32xf32>
    %cst_31 = arith.constant dense<0.000000e+00> : vector<8x32xf32>
    %54 = tpu.matmul %51, %53, %cst_31 {dimension_numbers = #tpu.dot_dimension_numbers<[1], [0], [0], [1], [0, 0, 1, 1], [], []>} : vector<8x128xf32>, vector<128x32xf32>, vector<8x32xf32> -> vector<8x32xf32>
    %55 = arith.subf %54, %36 : vector<8x32xf32>
    %56 = arith.mulf %55, %55 : vector<8x32xf32>
    %cst_32 = arith.constant dense<0.000000e+00> : vector<8xf32>
    %57 = vector.multi_reduction <add>, %56, %cst_32 [1] : vector<8x32xf32> to vector<8xf32>
    %58 = vector.shape_cast %57 : vector<8xf32> to vector<8x1xf32>
    %cst_33 = arith.constant 3.200000e+01 : f32
    %59 = vector.broadcast %cst_33 : f32 to vector<8x1xf32>
    %60 = arith.divf %58, %59 : vector<8x1xf32>
    %cst_34 = arith.constant 1.250000e+00 : f32
    %61 = vector.broadcast %cst_34 : f32 to vector<8x1xf32>
    %62 = arith.mulf %60, %61 : vector<8x1xf32>
    %63 = arith.addf %35, %62 : vector<8x1xf32>
    %64 = tpu.concatenate %26, %54 in 1 : vector<8x32xf32>, vector<8x32xf32> -> vector<8x64xf32>
    %c0_35 = arith.constant 0 : index
    %c0_36 = arith.constant 0 : index
    %65 = vector.load %arg7[%c0_35, %c0_36] : memref<64x32xf32, #tpu.memory_space<vmem>>, vector<64x32xf32>
    %cst_37 = arith.constant dense<0.000000e+00> : vector<8x32xf32>
    %66 = tpu.matmul %64, %65, %cst_37 {dimension_numbers = #tpu.dot_dimension_numbers<[1], [0], [0], [1], [0, 0, 1, 1], [], []>} : vector<8x64xf32>, vector<64x32xf32>, vector<8x32xf32> -> vector<8x32xf32>
    %c0_38 = arith.constant 0 : index
    %c0_39 = arith.constant 0 : index
    %67 = vector.load %arg8[%c0_38, %c0_39] : memref<1x32xf32, #tpu.memory_space<vmem>>, vector<1x32xf32>
    %68 = vector.broadcast %67 : vector<1x32xf32> to vector<8x32xf32>
    %69 = arith.addf %66, %68 : vector<8x32xf32>
    %c0_40 = arith.constant 0 : index
    %c0_41 = arith.constant 0 : index
    %70 = vector.load %arg9[%c0_40, %c0_41] : memref<8x32xf32, #tpu.memory_space<vmem>>, vector<8x32xf32>
    tpu.vector_store %arg9[%c0_40, %c0_41], %69 {strides = array<i32>} : memref<8x32xf32, #tpu.memory_space<vmem>>, vector<8x32xf32>,
    %71 = tpu.concatenate %19, %47 in 1 : vector<8x1xi32>, vector<8x1xi32> -> vector<8x2xi32>
    %c0_42 = arith.constant 0 : index
    %c0_43 = arith.constant 0 : index
    %72 = vector.load %arg10[%c0_42, %c0_43] : memref<8x2xi32, #tpu.memory_space<vmem>>, vector<8x2xi32>
    tpu.vector_store %arg10[%c0_42, %c0_43], %71 {strides = array<i32>} : memref<8x2xi32, #tpu.memory_space<vmem>>, vector<8x2xi32>,
    %cst_44 = arith.constant 5.000000e-01 : f32
    %73 = vector.broadcast %cst_44 : f32 to vector<8x1xf32>
    %74 = arith.mulf %63, %73 : vector<8x1xf32>
    %c0_45 = arith.constant 0 : index
    %c0_46 = arith.constant 0 : index
    %75 = vector.load %arg11[%c0_45, %c0_46] : memref<8x1xf32, #tpu.memory_space<vmem>>, vector<8x1xf32>
    tpu.vector_store %arg11[%c0_45, %c0_46], %74 {strides = array<i32>} : memref<8x1xf32, #tpu.memory_space<vmem>>, vector<8x1xf32>,
    return
  }
  func.func @transform_0(%arg0: i32) -> (i32, i32) {
    %c0_i32 = arith.constant 0 : i32
    %c0_i32_0 = arith.constant 0 : i32
    return %arg0, %c0_i32 : i32, i32
  }
  func.func @transform_1(%arg0: i32) -> (i32, i32) {
    %c0_i32 = arith.constant 0 : i32
    %c0_i32_0 = arith.constant 0 : i32
    %c0_i32_1 = arith.constant 0 : i32
    return %c0_i32, %c0_i32_0 : i32, i32
  }
  func.func @transform_2(%arg0: i32) -> (i32, i32) {
    %c0_i32 = arith.constant 0 : i32
    %c0_i32_0 = arith.constant 0 : i32
    %c0_i32_1 = arith.constant 0 : i32
    return %c0_i32, %c0_i32_0 : i32, i32
  }
  func.func @transform_3(%arg0: i32) -> (i32, i32, i32) {
    %c0_i32 = arith.constant 0 : i32
    %c0_i32_0 = arith.constant 0 : i32
    %c0_i32_1 = arith.constant 0 : i32
    %c0_i32_2 = arith.constant 0 : i32
    return %c0_i32, %c0_i32_0, %c0_i32_1 : i32, i32, i32
  }
  func.func @transform_4(%arg0: i32) -> (i32, i32, i32) {
    %c0_i32 = arith.constant 0 : i32
    %c0_i32_0 = arith.constant 0 : i32
    %c0_i32_1 = arith.constant 0 : i32
    %c0_i32_2 = arith.constant 0 : i32
    return %c0_i32, %c0_i32_0, %c0_i32_1 : i32, i32, i32
  }
  func.func @transform_5(%arg0: i32) -> (i32, i32, i32) {
    %c0_i32 = arith.constant 0 : i32
    %c0_i32_0 = arith.constant 0 : i32
    %c0_i32_1 = arith.constant 0 : i32
    %c0_i32_2 = arith.constant 0 : i32
    return %c0_i32, %c0_i32_0, %c0_i32_1 : i32, i32, i32
  }
  func.func @transform_6(%arg0: i32) -> (i32, i32) {
    %c0_i32 = arith.constant 0 : i32
    %c0_i32_0 = arith.constant 0 : i32
    %c0_i32_1 = arith.constant 0 : i32
    return %c0_i32, %c0_i32_0 : i32, i32
  }
  func.func @transform_7(%arg0: i32) -> (i32, i32) {
    %c0_i32 = arith.constant 0 : i32
    %c0_i32_0 = arith.constant 0 : i32
    %c0_i32_1 = arith.constant 0 : i32
    return %c0_i32, %c0_i32_0 : i32, i32
  }
  func.func @transform_8(%arg0: i32) -> (i32, i32) {
    %c0_i32 = arith.constant 0 : i32
    %c0_i32_0 = arith.constant 0 : i32
    return %arg0, %c0_i32 : i32, i32
  }
  func.func @transform_9(%arg0: i32) -> (i32, i32) {
    %c0_i32 = arith.constant 0 : i32
    %c0_i32_0 = arith.constant 0 : i32
    return %arg0, %c0_i32 : i32, i32
  }
  func.func @transform_10(%arg0: i32) -> (i32, i32) {
    %c0_i32 = arith.constant 0 : i32
    %c0_i32_0 = arith.constant 0 : i32
    return %arg0, %c0_i32 : i32, i32
  }
}

</mosaic_0001>

<llo_original>
// kernel: tpu_custom_call.1
$region0: #{tpu_custom_call.1}
  #allocation0 [shape = 'u32[]', space=smem, size = 0x4, offset = 0x4, fixed_abs, tag = 'smem constant byte address 0x4 - core index']
  #allocation1 [shape = 'u32[72,128]{1,0:T(1,128)}', space=vmem, size = 0x9000, scoped, tag = 'internal scratch']
  %s0 = inlined_call_operand.vmem [shape: f32[16,32], index: 0, kind: input, shape index: {}]
  %s1 = inlined_call_operand.vmem [shape: f32[32,64], index: 1, kind: input, shape index: {}]
  %s2 = inlined_call_operand.vmem [shape: f32[1,64], index: 2, kind: input, shape index: {}]
  %s3 = inlined_call_operand.vmem [shape: f32[2,128,32], index: 3, kind: input, shape index: {}]
  %s4 = inlined_call_operand.vmem [shape: f32[2,32,128], index: 4, kind: input, shape index: {}]
  %s5 = inlined_call_operand.vmem [shape: f32[2,1,128], index: 5, kind: input, shape index: {}]
  %s6 = inlined_call_operand.vmem [shape: f32[64,32], index: 6, kind: input, shape index: {}]
  %s7 = inlined_call_operand.vmem [shape: f32[1,32], index: 7, kind: input, shape index: {}]
  %s8 = inlined_call_operand.hbm [shape: f32[16,32], index: 8, kind: output, shape index: {0}]
  %s9 = inlined_call_operand.vmem [shape: s32[16,2], index: 9, kind: output, shape index: {1}]
  %s10 = inlined_call_operand.vmem [shape: f32[16,1], index: 10, kind: output, shape index: {2}]
  %11 = xla_tuple %s8, %s9, %s10
  %s12 = sld [smem:[#allocation0]]
  $region81: #{tpu_custom_call.1} parent=0
    _
  %s14 = ssub.s32 1, %s12
  %s15 = scalar_select 0, %s14, %s12
  $region1: #{tpu_custom_call.1} parent=0
    #allocation2 [shape = 'u8[8192]{0}', space=vmem, size = 0x2000, scoped, tag = 'output window, operand 0']
    #allocation3 [shape = 's32[2]{0}', space=sflag, size = 0x8, scoped, tag = 'scoped memory for tpu_custom_call.1']
    %16 = vsyncpa [#allocation3], 0
    %s17 = scalar_lea.sflag [#allocation3], 1
    %18 = vsyncpa %s17, 0
    loop: start=0, step=1, limit=4
    $region2: #{tpu_custom_call.1} parent=1 // loop_pre_header
      _
    $region3: #{tpu_custom_call.1} parent=1 // loop_header
      %s20 = sphi 0, %s24
      %p21 = scmp.ge.s32.totalorder %s20, 4
      %s30 = sphi 0, %s32
      %s33 = sphi 0, %s30
      %s34 = sphi 0, %s33
      %s50 = sphi 0, %s34
      %s54 = sphi 0, %s54
      %s56 = sphi 0, %s54
      %s57 = sphi 0, %s56
      %s71 = sphi 0, %s57
      %s75 = sphi 0, %s75
      %s77 = sphi 0, %s75
      %s78 = sphi 0, %s77
      %s92 = sphi 0, %s78
      %s96 = sphi 0, %s96
      %s98 = sphi 0, %s96
      %s99 = sphi 0, %s98
      %s113 = sphi 0, %s99
      %s117 = sphi 0, %s117
      %s119 = sphi 0, %s117
      %s120 = sphi 0, %s119
      %s134 = sphi 0, %s120
      %s138 = sphi 0, %s138
      %s140 = sphi 0, %s138
      %s141 = sphi 0, %s140
      %s155 = sphi 0, %s141
      %s159 = sphi 0, %s159
      %s161 = sphi 0, %s159
      %s162 = sphi 0, %s161
      %s176 = sphi 0, %s162
      %s180 = sphi 0, %s180
      %s182 = sphi 0, %s180
      %s183 = sphi 0, %s182
      %s197 = sphi 0, %s183
      %s203 = sphi 0, %s205
      %s206 = sphi 0, %s203
      %s207 = sphi 0, %s206
      %s223 = sphi 0, %s207
      %s229 = sphi 0, %s231
      %s232 = sphi 0, %s229
      %s233 = sphi 0, %s232
      %s249 = sphi 0, %s233
      %s255 = sphi 0, %s257
      %s258 = sphi 0, %s255
      %s259 = sphi 0, %s258
      %s275 = sphi 0, %s259
    $region4: #{tpu_custom_call.1} parent=1 // loop_header_branch
      %23 = sbr.rel (%p21) target = $region8
    $region5: #{tpu_custom_call.1} parent=1 // loop_body
      %s25 = ssub.s32 %s20, 1
      %s26 = ssub.s32 %s20, 2
      %s27 = sadd.s32 %s20, 1
      %s28 = ssub.s32 %s20, %s27
      %p29 = scmp.eq.s32.totalorder %s28, 0
      %s31 = sadd.s32 %s30, 1
      %s32 = scalar_select %p29, %s30, %s31
      %p35 = pneg %p29
      %p36 = scmp.eq.s32.totalorder %s20, 1
      %p37 = por %p35, %p36
      %p38 = scmp.ne.s32.totalorder %s30, %s33
      %p39 = scmp.eq.s32.totalorder %s20, 0
      %p40 = por %p38, %p39
      %p41 = scmp.ne.s32.totalorder %s30, %s33
      %p42 = scmp.eq.s32.totalorder %s25, 1
      %p43 = por %p41, %p42
      %p44 = scmp.ne.s32.totalorder %s33, %s34
      %p45 = scmp.eq.s32.totalorder %s25, 0
      %p46 = por %p44, %p45
      %p47 = scmp.ne.s32.totalorder %s33, %s34
      %p48 = scmp.eq.s32.totalorder %s26, 1
      %p49 = por %p47, %p48
      %p51 = scmp.ne.s32.totalorder %s34, %s50
      %p52 = scmp.eq.s32.totalorder %s26, 0
      %p53 = por %p51, %p52
      %s55 = sadd.s32 %s54, 1
      %p58 = scmp.eq.s32.totalorder %s20, 1
      %p59 = scmp.ne.s32.totalorder %s54, %s56
      %p60 = scmp.eq.s32.totalorder %s20, 0
      %p61 = por %p59, %p60
      %p62 = scmp.ne.s32.totalorder %s54, %s56
      %p63 = scmp.eq.s32.totalorder %s25, 1
      %p64 = por %p62, %p63
      %p65 = scmp.ne.s32.totalorder %s56, %s57
      %p66 = scmp.eq.s32.totalorder %s25, 0
      %p67 = por %p65, %p66
      %p68 = scmp.ne.s32.totalorder %s56, %s57
      %p69 = scmp.eq.s32.totalorder %s26, 1
      %p70 = por %p68, %p69
      %p72 = scmp.ne.s32.totalorder %s57, %s71
      %p73 = scmp.eq.s32.totalorder %s26, 0
      %p74 = por %p72, %p73
      %s76 = sadd.s32 %s75, 1
      %p79 = scmp.eq.s32.totalorder %s20, 1
      %p80 = scmp.ne.s32.totalorder %s75, %s77
      %p81 = scmp.eq.s32.totalorder %s20, 0
      %p82 = por %p80, %p81
      %p83 = scmp.ne.s32.totalorder %s75, %s77
      %p84 = scmp.eq.s32.totalorder %s25, 1
      %p85 = por %p83, %p84
      %p86 = scmp.ne.s32.totalorder %s77, %s78
      %p87 = scmp.eq.s32.totalorder %s25, 0
      %p88 = por %p86, %p87
      %p89 = scmp.ne.s32.totalorder %s77, %s78
      %p90 = scmp.eq.s32.totalorder %s26, 1
      %p91 = por %p89, %p90
      %p93 = scmp.ne.s32.totalorder %s78, %s92
      %p94 = scmp.eq.s32.totalorder %s26, 0
      %p95 = por %p93, %p94
      %s97 = sadd.s32 %s96, 1
      %p100 = scmp.eq.s32.totalorder %s20, 1
      %p101 = scmp.ne.s32.totalorder %s96, %s98
      %p102 = scmp.eq.s32.totalorder %s20, 0
      %p103 = por %p101, %p102
      %p104 = scmp.ne.s32.totalorder %s96, %s98
      %p105 = scmp.eq.s32.totalorder %s25, 1
      %p106 = por %p104, %p105
      %p107 = scmp.ne.s32.totalorder %s98, %s99
      %p108 = scmp.eq.s32.totalorder %s25, 0
      %p109 = por %p107, %p108
      %p110 = scmp.ne.s32.totalorder %s98, %s99
      %p111 = scmp.eq.s32.totalorder %s26, 1
      %p112 = por %p110, %p111
      %p114 = scmp.ne.s32.totalorder %s99, %s113
      %p115 = scmp.eq.s32.totalorder %s26, 0
      %p116 = por %p114, %p115
      %s118 = sadd.s32 %s117, 1
      %p121 = scmp.eq.s32.totalorder %s20, 1
      %p122 = scmp.ne.s32.totalorder %s117, %s119
      %p123 = scmp.eq.s32.totalorder %s20, 0
      %p124 = por %p122, %p123
      %p125 = scmp.ne.s32.totalorder %s117, %s119
      %p126 = scmp.eq.s32.totalorder %s25, 1
      %p127 = por %p125, %p126
      %p128 = scmp.ne.s32.totalorder %s119, %s120
      %p129 = scmp.eq.s32.totalorder %s25, 0
      %p130 = por %p128, %p129
      %p131 = scmp.ne.s32.totalorder %s119, %s120
      %p132 = scmp.eq.s32.totalorder %s26, 1
      %p133 = por %p131, %p132
      %p135 = scmp.ne.s32.totalorder %s120, %s134
      %p136 = scmp.eq.s32.totalorder %s26, 0
      %p137 = por %p135, %p136
      %s139 = sadd.s32 %s138, 1
      %p142 = scmp.eq.s32.totalorder %s20, 1
      %p143 = scmp.ne.s32.totalorder %s138, %s140
      %p144 = scmp.eq.s32.totalorder %s20, 0
      %p145 = por %p143, %p144
      %p146 = scmp.ne.s32.totalorder %s138, %s140
      %p147 = scmp.eq.s32.totalorder %s25, 1
      %p148 = por %p146, %p147
      %p149 = scmp.ne.s32.totalorder %s140, %s141
      %p150 = scmp.eq.s32.totalorder %s25, 0
      %p151 = por %p149, %p150
      %p152 = scmp.ne.s32.totalorder %s140, %s141
      %p153 = scmp.eq.s32.totalorder %s26, 1
      %p154 = por %p152, %p153
      %p156 = scmp.ne.s32.totalorder %s141, %s155
      %p157 = scmp.eq.s32.totalorder %s26, 0
      %p158 = por %p156, %p157
      %s160 = sadd.s32 %s159, 1
      %p163 = scmp.eq.s32.totalorder %s20, 1
      %p164 = scmp.ne.s32.totalorder %s159, %s161
      %p165 = scmp.eq.s32.totalorder %s20, 0
      %p166 = por %p164, %p165
      %p167 = scmp.ne.s32.totalorder %s159, %s161
      %p168 = scmp.eq.s32.totalorder %s25, 1
      %p169 = por %p167, %p168
      %p170 = scmp.ne.s32.totalorder %s161, %s162
      %p171 = scmp.eq.s32.totalorder %s25, 0
      %p172 = por %p170, %p171
      %p173 = scmp.ne.s32.totalorder %s161, %s162
      %p174 = scmp.eq.s32.totalorder %s26, 1
      %p175 = por %p173, %p174
      %p177 = scmp.ne.s32.totalorder %s162, %s176
      %p178 = scmp.eq.s32.totalorder %s26, 0
      %p179 = por %p177, %p178
      %s181 = sadd.s32 %s180, 1
      %p184 = scmp.eq.s32.totalorder %s20, 1
      %p185 = scmp.ne.s32.totalorder %s180, %s182
      %p186 = scmp.eq.s32.totalorder %s20, 0
      %p187 = por %p185, %p186
      %p188 = scmp.ne.s32.totalorder %s180, %s182
      %p189 = scmp.eq.s32.totalorder %s25, 1
      %p190 = por %p188, %p189
      %p191 = scmp.ne.s32.totalorder %s182, %s183
      %p192 = scmp.eq.s32.totalorder %s25, 0
      %p193 = por %p191, %p192
      %p194 = scmp.ne.s32.totalorder %s182, %s183
      %p195 = scmp.eq.s32.totalorder %s26, 1
      %p196 = por %p194, %p195
      %p198 = scmp.ne.s32.totalorder %s183, %s197
      %p199 = scmp.eq.s32.totalorder %s26, 0
      %p200 = por %p198, %p199
      %s201 = ssub.s32 %s20, %s27
      %p202 = scmp.eq.s32.totalorder %s201, 0
      %s204 = sadd.s32 %s203, 1
      %s205 = scalar_select %p202, %s203, %s204
      %p208 = pneg %p202
      %p209 = scmp.eq.s32.totalorder %s20, 1
      %p210 = por %p208, %p209
      %p211 = scmp.ne.s32.totalorder %s203, %s206
      %p212 = scmp.eq.s32.totalorder %s20, 0
      %p213 = por %p211, %p212
      %p214 = scmp.ne.s32.totalorder %s203, %s206
      %p215 = scmp.eq.s32.totalorder %s25, 1
      %p216 = por %p214, %p215
      %p217 = scmp.ne.s32.totalorder %s206, %s207
      %p218 = scmp.eq.s32.totalorder %s25, 0
      %p219 = por %p217, %p218
      %p220 = scmp.ne.s32.totalorder %s206, %s207
      %p221 = scmp.eq.s32.totalorder %s26, 1
      %p222 = por %p220, %p221
      %p224 = scmp.ne.s32.totalorder %s207, %s223
      %p225 = scmp.eq.s32.totalorder %s26, 0
      %p226 = por %p224, %p225
      %s227 = ssub.s32 %s20, %s27
      %p228 = scmp.eq.s32.totalorder %s227, 0
      %s230 = sadd.s32 %s229, 1
      %s231 = scalar_select %p228, %s229, %s230
      %p234 = pneg %p228
      %p235 = scmp.eq.s32.totalorder %s20, 1
      %p236 = por %p234, %p235
      %p237 = scmp.ne.s32.totalorder %s229, %s232
      %p238 = scmp.eq.s32.totalorder %s20, 0
      %p239 = por %p237, %p238
      %p240 = scmp.ne.s32.totalorder %s229, %s232
      %p241 = scmp.eq.s32.totalorder %s25, 1
      %p242 = por %p240, %p241
      %p243 = scmp.ne.s32.totalorder %s232, %s233
      %p244 = scmp.eq.s32.totalorder %s25, 0
      %p245 = por %p243, %p244
      %p246 = scmp.ne.s32.totalorder %s232, %s233
      %p247 = scmp.eq.s32.totalorder %s26, 1
      %p248 = por %p246, %p247
      %p250 = scmp.ne.s32.totalorder %s233, %s249
      %p251 = scmp.eq.s32.totalorder %s26, 0
      %p252 = por %p250, %p251
      %s253 = ssub.s32 %s20, %s27
      %p254 = scmp.eq.s32.totalorder %s253, 0
      %s256 = sadd.s32 %s255, 1
      %s257 = scalar_select %p254, %s255, %s256
      %p260 = pneg %p254
      %p261 = scmp.eq.s32.totalorder %s20, 1
      %p262 = por %p260, %p261
      %p263 = scmp.ne.s32.totalorder %s255, %s258
      %p264 = scmp.eq.s32.totalorder %s20, 0
      %p265 = por %p263, %p264
      %p266 = scmp.ne.s32.totalorder %s255, %s258
      %p267 = scmp.eq.s32.totalorder %s25, 1
      %p268 = por %p266, %p267
      %p269 = scmp.ne.s32.totalorder %s258, %s259
      %p270 = scmp.eq.s32.totalorder %s25, 0
      %p271 = por %p269, %p270
      %p272 = scmp.ne.s32.totalorder %s258, %s259
      %p273 = scmp.eq.s32.totalorder %s26, 1
      %p274 = por %p272, %p273
      %p276 = scmp.ne.s32.totalorder %s259, %s275
      %p277 = scmp.eq.s32.totalorder %s26, 0
      %p278 = por %p276, %p277
      %p279 = scmp.le.s32.totalorder 1, %s20
      %p280 = scmp.lt.s32.totalorder %s20, 3
      %p281 = pnand %p279, %p280
      %p282 = pneg %p281
      // Predicated region
      $region9: #{tpu_custom_call.1} parent=5 // pred_check
        _
      $region10: #{tpu_custom_call.1} parent=5 // pred_check_branch
        %284 = sbr.rel (%p281) target = $region12
      $region11: #{tpu_custom_call.1} parent=5 // pred_region
        %s285 = ssub.s32 %s20, 1
        // Predicated region
        $region13: #{tpu_custom_call.1} parent=11 // pred_check
          %p286 = pneg %p67
        $region14: #{tpu_custom_call.1} parent=11 // pred_check_branch
          %288 = sbr.rel (%p286) target = $region16
        $region15: #{tpu_custom_call.1} parent=11 // pred_region
          _
        $region16: #{tpu_custom_call.1} parent=11 // pred_fallthru
          _
        // Predicated region
        $region17: #{tpu_custom_call.1} parent=11 // pred_check
          %p289 = pneg %p88
        $region18: #{tpu_custom_call.1} parent=11 // pred_check_branch
          %291 = sbr.rel (%p289) target = $region20
        $region19: #{tpu_custom_call.1} parent=11 // pred_region
          _
        $region20: #{tpu_custom_call.1} parent=11 // pred_fallthru
          _
        // Predicated region
        $region21: #{tpu_custom_call.1} parent=11 // pred_check
          %p292 = pneg %p109
        $region22: #{tpu_custom_call.1} parent=11 // pred_check_branch
          %294 = sbr.rel (%p292) target = $region24
        $region23: #{tpu_custom_call.1} parent=11 // pred_region
          _
        $region24: #{tpu_custom_call.1} parent=11 // pred_fallthru
          _
        // Predicated region
        $region25: #{tpu_custom_call.1} parent=11 // pred_check
          %p295 = pneg %p130
        $region26: #{tpu_custom_call.1} parent=11 // pred_check_branch
          %297 = sbr.rel (%p295) target = $region28
        $region27: #{tpu_custom_call.1} parent=11 // pred_region
          _
        $region28: #{tpu_custom_call.1} parent=11 // pred_fallthru
          _
        // Predicated region
        $region29: #{tpu_custom_call.1} parent=11 // pred_check
          %p298 = pneg %p151
        $region30: #{tpu_custom_call.1} parent=11 // pred_check_branch
          %300 = sbr.rel (%p298) target = $region32
        $region31: #{tpu_custom_call.1} parent=11 // pred_region
          _
        $region32: #{tpu_custom_call.1} parent=11 // pred_fallthru
          _
        // Predicated region
        $region33: #{tpu_custom_call.1} parent=11 // pred_check
          %p301 = pneg %p172
        $region34: #{tpu_custom_call.1} parent=11 // pred_check_branch
          %303 = sbr.rel (%p301) target = $region36
        $region35: #{tpu_custom_call.1} parent=11 // pred_region
          _
        $region36: #{tpu_custom_call.1} parent=11 // pred_fallthru
          _
        // Predicated region
        $region37: #{tpu_custom_call.1} parent=11 // pred_check
          %p304 = pneg %p193
        $region38: #{tpu_custom_call.1} parent=11 // pred_check_branch
          %306 = sbr.rel (%p304) target = $region40
        $region39: #{tpu_custom_call.1} parent=11 // pred_region
          _
        $region40: #{tpu_custom_call.1} parent=11 // pred_fallthru
          _
      $region12: #{tpu_custom_call.1} parent=5 // pred_fallthru
        _
      %p307 = scmp.lt.s32.totalorder %s20, 2
      // Predicated region
      $region41: #{tpu_custom_call.1} parent=5 // pred_check
        %p308 = pneg %p307
      $region42: #{tpu_custom_call.1} parent=5 // pred_check_branch
        %310 = sbr.rel (%p308) target = $region44
      $region43: #{tpu_custom_call.1} parent=5 // pred_region
        // Predicated region
        $region45: #{tpu_custom_call.1} parent=43 // pred_check
          %p311 = pneg %p40
        $region46: #{tpu_custom_call.1} parent=43 // pred_check_branch
          %313 = sbr.rel (%p311) target = $region48
        $region47: #{tpu_custom_call.1} parent=43 // pred_region
          %p314 = scmp.lt.s32.totalorder %s20, 1
          %s315 = scalar_select %p314, %s20, 1
          %s316 = smul.addr %s315, 8
          %s317 = scalar_lea.vmem %s0, %s316
        $region48: #{tpu_custom_call.1} parent=43 // pred_fallthru
          _
      $region44: #{tpu_custom_call.1} parent=5 // pred_fallthru
        _
      %p318 = scmp.le.s32.totalorder 1, %s20
      %p319 = scmp.lt.s32.totalorder %s20, 3
      %p320 = pnand %p318, %p319
      %p321 = pneg %p320
      // Predicated region
      $region49: #{tpu_custom_call.1} parent=5 // pred_check
        _
      $region50: #{tpu_custom_call.1} parent=5 // pred_check_branch
        %323 = sbr.rel (%p320) target = $region52
      $region51: #{tpu_custom_call.1} parent=5 // pred_region
        %s324 = ssub.s32 %s20, 1
        %p325 = scmp.lt.s32.totalorder %s25, 1
        %s326 = scalar_select %p325, %s25, 1
        %s327 = smul.addr %s326, 8
        %s328 = scalar_lea.vmem %s0, %s327
        %p329 = pneg %p46
        %p330 = pneg %p43
        %p331 = pneg %p67
        %p332 = pneg %p64
        %p333 = pneg %p88
        %p334 = pneg %p85
        %p335 = pneg %p109
        %p336 = pneg %p106
        %p337 = pneg %p130
        %p338 = pneg %p127
        %p339 = pneg %p151
        %p340 = pneg %p148
        %p341 = pneg %p172
        %p342 = pneg %p169
        %p343 = pneg %p193
        %p344 = pneg %p190
        %p345 = pneg %p219
        %p346 = pneg %p216
        %s347 = sand.u32 %s206, 1
        %s348 = scalar_lea.sflag [#allocation3], %s347
        %s349 = sand.u32 %s206, 1
        %s350 = smul.addr %s349, 8
        %s351 = scalar_lea.vmem [#allocation2], %s350
        %p352 = pneg %p245
        %p353 = pneg %p242
        %p354 = scmp.lt.s32.totalorder %s25, 1
        %s355 = scalar_select %p354, %s25, 1
        %s356 = smul.addr %s355, 8
        %s357 = scalar_lea.vmem %s9, %s356
        %p358 = pneg %p271
        %p359 = pneg %p268
        %p360 = scmp.lt.s32.totalorder %s25, 1
        %s361 = scalar_select %p360, %s25, 1
        %s362 = smul.addr %s361, 8
        %s363 = scalar_lea.vmem %s10, %s362
        %p364 = scmp.lt.s32.totalorder %s25, 1
        %s365 = scalar_select %p364, %s25, 1
        %s366 = smul.addr %s365, 8
        %s367 = scalar_lea.vmem %s0, %s366
        %p368 = scmp.lt.s32.totalorder %s25, 1
        %s369 = scalar_select %p368, %s25, 1
        %s370 = smul.addr %s369, 8
        %s371 = scalar_lea.vmem %s9, %s370
        %p372 = scmp.lt.s32.totalorder %s25, 1
        %s373 = scalar_select %p372, %s25, 1
        %s374 = smul.addr %s373, 8
        %s375 = scalar_lea.vmem %s10, %s374
        %v376 = vld [vmem:[%s367] sm:$0xff]
        %v377 = vld [vmem:[%s1] sm:$0xff]
        %v378 = vld [vmem:[%s1 + $0x8] sm:$0xff]
        %v379 = vld [vmem:[%s1 + $0x10] sm:$0xff]
        %v380 = vld [vmem:[%s1 + $0x18] sm:$0xff]
        %v381 = vld [vmem:[%s2] sm:$0x1]
        %v383 = vperm.slane %v381, 0
        %vm385 = vcmask 261120
        %v387 = vsel %vm385, %v376, 0
        %389 = vmatpush.msra.mxu0 0.0
        %390 = vmatpush.msra.mxu0 0.0
        %391 = vmatpush.msra.mxu0 0.0
        %392 = vmatpush.msra.mxu0 0.0
        %393 = vmatpush.msra.mxu0 0.0
        %394 = vmatpush.msra.mxu0 0.0
        %395 = vmatpush.msra.mxu0 0.0
        %396 = vmatpush.msra.mxu0 0.0
        %397 = vmatpush.msra.mxu0 0.0
        %398 = vmatpush.msra.mxu0 0.0
        %399 = vmatpush.msra.mxu0 0.0
        %400 = vmatpush.msra.mxu0 0.0
        %401 = vmatpush.msra.mxu0 %v380
        %402 = vmatpush.msra.mxu0 %v379
        %403 = vmatpush.msra.mxu0 %v378
        %404 = vmatpush.msra.mxu0 %v377
        %405 = vmatmul.f32.gmra.mxu0 %v387
        %v406 = vpop.f32.mrf.mxu0
        %v407 = vadd.f32 %v383, %v406
        %408 = vdwg.mxu0
        %v409 = vlaneseq
        %v410 = vand.u32 %v409, 127
        %v411 = vld [vmem:[%s5] sm:$0x1]
        %v412 = vld [vmem:[%s4] sm:$0xff]
        %v413 = vld [vmem:[%s4 + $0x8] sm:$0xff]
        %v414 = vld [vmem:[%s4 + $0x10] sm:$0xff]
        %v415 = vld [vmem:[%s4 + $0x18] sm:$0xff]
        %v417 = vsel %vm385, %v407, 0
        %419 = vmatpush.msra.mxu0 0.0
        %420 = vmatpush.msra.mxu0 0.0
        %421 = vmatpush.msra.mxu0 0.0
        %422 = vmatpush.msra.mxu0 0.0
        %423 = vmatpush.msra.mxu0 0.0
        %424 = vmatpush.msra.mxu0 0.0
        %425 = vmatpush.msra.mxu0 0.0
        %426 = vmatpush.msra.mxu0 0.0
        %427 = vmatpush.msra.mxu0 0.0
        %428 = vmatpush.msra.mxu0 0.0
        %429 = vmatpush.msra.mxu0 0.0
        %430 = vmatpush.msra.mxu0 0.0
        %431 = vmatpush.msra.mxu0 %v415
        %432 = vmatpush.msra.mxu0 %v414
        %433 = vmatpush.msra.mxu0 %v413
        %434 = vmatpush.msra.mxu0 %v412
        %435 = vmatmul.f32.gmra.mxu0 %v417
        %v436 = vpop.f32.mrf.mxu0
        %v437 = vadd.f32 0.0, %v436
        %438 = vdwg.mxu0
        %v439 = vmul.f32 %v437, 2.0
        %v441 = vperm.slane %v411, 0
        %v443 = vsub.f32 %v441, %v439
        %444 = vmin.index.xlane.f32.xlu0 %v443
        %v445 = vpop.xlane.xlu0 %444
        %vm446 = vcmp.eq.s32.totalorder %v410, %v445
        %v447 = vsel %vm446, 1, 0
        %v448 = vcvt.s32.f32 %v447
        %v449 = vld [vmem:[%s3] sm:$0xff]
        %v450 = vld [vmem:[%s3 + $0x8] sm:$0xff]
        %v451 = vld [vmem:[%s3 + $0x10] sm:$0xff]
        %v452 = vld [vmem:[%s3 + $0x18] sm:$0xff]
        %v453 = vld [vmem:[%s3 + $0x20] sm:$0xff]
        %v454 = vld [vmem:[%s3 + $0x28] sm:$0xff]
        %v455 = vld [vmem:[%s3 + $0x30] sm:$0xff]
        %v456 = vld [vmem:[%s3 + $0x38] sm:$0xff]
        %v457 = vld [vmem:[%s3 + $0x40] sm:$0xff]
        %v458 = vld [vmem:[%s3 + $0x48] sm:$0xff]
        %v459 = vld [vmem:[%s3 + $0x50] sm:$0xff]
        %v460 = vld [vmem:[%s3 + $0x58] sm:$0xff]
        %v461 = vld [vmem:[%s3 + $0x60] sm:$0xff]
        %v462 = vld [vmem:[%s3 + $0x68] sm:$0xff]
        %v463 = vld [vmem:[%s3 + $0x70] sm:$0xff]
        %v464 = vld [vmem:[%s3 + $0x78] sm:$0xff]
        %465 = vmatpush.msra.mxu0 %v464
        %466 = vmatpush.msra.mxu0 %v463
        %467 = vmatpush.msra.mxu0 %v462
        %468 = vmatpush.msra.mxu0 %v461
        %469 = vmatpush.msra.mxu0 %v460
        %470 = vmatpush.msra.mxu0 %v459
        %471 = vmatpush.msra.mxu0 %v458
        %472 = vmatpush.msra.mxu0 %v457
        %473 = vmatpush.msra.mxu0 %v456
        %474 = vmatpush.msra.mxu0 %v455
        %475 = vmatpush.msra.mxu0 %v454
        %476 = vmatpush.msra.mxu0 %v453
        %477 = vmatpush.msra.mxu0 %v452
        %478 = vmatpush.msra.mxu0 %v451
        %479 = vmatpush.msra.mxu0 %v450
        %480 = vmatpush.msra.mxu0 %v449
        %481 = vmatmul.f32.gmra.mxu0 %v448
        %v482 = vpop.f32.mrf.mxu0
        %v483 = vadd.f32 0.0, %v482
        %484 = vdwg.mxu0
        %v485 = vsub.f32 %v483, %v407
        %v486 = vmul.f32 %v485, %v485
        %v487 = vsel %vm385, %v486, 0.0
        %488 = vadd.xlane.f32.xlu0 %v487
        %v489 = vpop.xlane.xlu0 %488
        %v490 = vrcp.pop 32.0
        %v491 = vmul.f32 32.0, %v490
        %v492 = vsub.f32 1.0, %v491
        %v493 = vmul.f32 %v490, %v492
        %v494 = vadd.f32 %v490, %v493
        %vm495 = vweird.f32 %v490
        %v496 = vsel %vm495, %v490, %v494
        %v497 = vmul.f32 %v489, %v496
        %v498 = vmul.f32 %v497, 1.25
        %v499 = vadd.f32 %v498, 0.0
        %s500 = scalar_lea.vmem %s5, 1
        %v501 = vld [vmem:[%s500] sm:$0x1]
        %s502 = scalar_lea.vmem %s4, 32
        %v503 = vld [vmem:[%s502] sm:$0xff]
        %v504 = vld [vmem:[%s502 + $0x8] sm:$0xff]
        %v505 = vld [vmem:[%s502 + $0x10] sm:$0xff]
        %v506 = vld [vmem:[%s502 + $0x18] sm:$0xff]
        %507 = vrot.lane.b32.xlu0 %v407, 96
        %v508 = vpop.permute.xlu0 %507
        %v509 = vsel %vm385, %v508, 0
        %511 = vmatpush.msra.mxu0 0.0
        %512 = vmatpush.msra.mxu0 0.0
        %513 = vmatpush.msra.mxu0 0.0
        %514 = vmatpush.msra.mxu0 0.0
        %515 = vmatpush.msra.mxu0 0.0
        %516 = vmatpush.msra.mxu0 0.0
        %517 = vmatpush.msra.mxu0 0.0
        %518 = vmatpush.msra.mxu0 0.0
        %519 = vmatpush.msra.mxu0 0.0
        %520 = vmatpush.msra.mxu0 0.0
        %521 = vmatpush.msra.mxu0 0.0
        %522 = vmatpush.msra.mxu0 0.0
        %523 = vmatpush.msra.mxu0 %v506
        %524 = vmatpush.msra.mxu0 %v505
        %525 = vmatpush.msra.mxu0 %v504
        %526 = vmatpush.msra.mxu0 %v503
        %527 = vmatmul.f32.gmra.mxu0 %v509
        %v528 = vpop.f32.mrf.mxu0
        %v529 = vadd.f32 0.0, %v528
        %530 = vdwg.mxu0
        %v531 = vmul.f32 %v529, 2.0
        %v533 = vperm.slane %v501, 0
        %v535 = vsub.f32 %v533, %v531
        %536 = vmin.index.xlane.f32.xlu0 %v535
        %v537 = vpop.xlane.xlu0 %536
        %vm538 = vcmp.eq.s32.totalorder %v410, %v537
        %v539 = vsel %vm538, 1, 0
        %v540 = vcvt.s32.f32 %v539
        %s541 = scalar_lea.vmem %s3, 128
        %v542 = vld [vmem:[%s541] sm:$0xff]
        %v543 = vld [vmem:[%s541 + $0x8] sm:$0xff]
        %v544 = vld [vmem:[%s541 + $0x10] sm:$0xff]
        %v545 = vld [vmem:[%s541 + $0x18] sm:$0xff]
        %v546 = vld [vmem:[%s541 + $0x20] sm:$0xff]
        %v547 = vld [vmem:[%s541 + $0x28] sm:$0xff]
        %v548 = vld [vmem:[%s541 + $0x30] sm:$0xff]
        %v549 = vld [vmem:[%s541 + $0x38] sm:$0xff]
        %v550 = vld [vmem:[%s541 + $0x40] sm:$0xff]
        %v551 = vld [vmem:[%s541 + $0x48] sm:$0xff]
        %v552 = vld [vmem:[%s541 + $0x50] sm:$0xff]
        %v553 = vld [vmem:[%s541 + $0x58] sm:$0xff]
        %v554 = vld [vmem:[%s541 + $0x60] sm:$0xff]
        %v555 = vld [vmem:[%s541 + $0x68] sm:$0xff]
        %v556 = vld [vmem:[%s541 + $0x70] sm:$0xff]
        %v557 = vld [vmem:[%s541 + $0x78] sm:$0xff]
        %558 = vmatpush.msra.mxu0 %v557
        %559 = vmatpush.msra.mxu0 %v556
        %560 = vmatpush.msra.mxu0 %v555
        %561 = vmatpush.msra.mxu0 %v554
        %562 = vmatpush.msra.mxu0 %v553
        %563 = vmatpush.msra.mxu0 %v552
        %564 = vmatpush.msra.mxu0 %v551
        %565 = vmatpush.msra.mxu0 %v550
        %566 = vmatpush.msra.mxu0 %v549
        %567 = vmatpush.msra.mxu0 %v548
        %568 = vmatpush.msra.mxu0 %v547
        %569 = vmatpush.msra.mxu0 %v546
        %570 = vmatpush.msra.mxu0 %v545
        %571 = vmatpush.msra.mxu0 %v544
        %572 = vmatpush.msra.mxu0 %v543
        %573 = vmatpush.msra.mxu0 %v542
        %574 = vmatmul.f32.gmra.mxu0 %v540
        %v575 = vpop.f32.mrf.mxu0
        %v576 = vadd.f32 0.0, %v575
        %577 = vdwg.mxu0
        %v579 = vsub.f32 %v576, %v508
        %v580 = vmul.f32 %v579, %v579
        %v581 = vsel %vm385, %v580, 0.0
        %582 = vadd.xlane.f32.xlu0 %v581
        %v583 = vpop.xlane.xlu0 %582
        %v584 = vmul.f32 %v583, %v496
        %v585 = vmul.f32 %v584, 1.25
        %v586 = vadd.f32 %v499, %v585
        %588 = vrot.lane.b32.xlu0 %v576, 32
        %v589 = vpop.permute.xlu0 %588
        %v591 = vsel %vm385, %v483, %v589
        %v592 = vld [vmem:[%s6] sm:$0xff]
        %v593 = vld [vmem:[%s6 + $0x8] sm:$0xff]
        %v594 = vld [vmem:[%s6 + $0x10] sm:$0xff]
        %v595 = vld [vmem:[%s6 + $0x18] sm:$0xff]
        %v596 = vld [vmem:[%s6 + $0x20] sm:$0xff]
        %v597 = vld [vmem:[%s6 + $0x28] sm:$0xff]
        %v598 = vld [vmem:[%s6 + $0x30] sm:$0xff]
        %v599 = vld [vmem:[%s6 + $0x38] sm:$0xff]
        %v600 = vld [vmem:[%s7] sm:$0x1]
        %v602 = vperm.slane %v600, 0
        %vm604 = vcmask 523264
        %v606 = vsel %vm604, %v591, 0
        %608 = vmatpush.msra.mxu0 0.0
        %609 = vmatpush.msra.mxu0 0.0
        %610 = vmatpush.msra.mxu0 0.0
        %611 = vmatpush.msra.mxu0 0.0
        %612 = vmatpush.msra.mxu0 0.0
        %613 = vmatpush.msra.mxu0 0.0
        %614 = vmatpush.msra.mxu0 0.0
        %615 = vmatpush.msra.mxu0 0.0
        %616 = vmatpush.msra.mxu0 %v599
        %617 = vmatpush.msra.mxu0 %v598
        %618 = vmatpush.msra.mxu0 %v597
        %619 = vmatpush.msra.mxu0 %v596
        %620 = vmatpush.msra.mxu0 %v595
        %621 = vmatpush.msra.mxu0 %v594
        %622 = vmatpush.msra.mxu0 %v593
        %623 = vmatpush.msra.mxu0 %v592
        %624 = vmatmul.f32.gmra.mxu0 %v606
        %v625 = vpop.f32.mrf.mxu0
        %v626 = vadd.f32 %v602, %v625
        %627 = vdwg.mxu0
        %628 = vst.msk [vmem:[%s351] sm:$0xff] %vm385, %v626
        %vm629 = vcmask 7168
        %v630 = vsel %vm629, %v445, %v537
        %vm631 = vcmask 15360
        %632 = vst.msk [vmem:[%s371] sm:$0xff] %vm631, %v630
        %v633 = vmul.f32 %v586, 0.5
        %634 = vst.msk [vmem:[%s375] sm:$0xff] %vm629, %v633
        %s635 = sand.u32 %s206, 1
        %s636 = scalar_lea.sflag [#allocation3], %s635
        %s637 = sand.u32 %s206, 1
        %s638 = smul.addr %s637, 8
        %s639 = scalar_lea.vmem [#allocation2], %s638
        %p640 = scmp.lt.s32.totalorder %s25, 1
        %s641 = scalar_select %p640, %s25, 1
        %s642 = smul.addr %s641, 8
        %s643 = scalar_lea.vmem %s9, %s642
        %p644 = scmp.lt.s32.totalorder %s25, 1
        %s645 = scalar_select %p644, %s25, 1
        %s646 = smul.addr %s645, 8
        %s647 = scalar_lea.vmem %s10, %s646
        // Predicated region
        $region53: #{tpu_custom_call.1} parent=51 // pred_check
          %p648 = pneg %p216
        $region54: #{tpu_custom_call.1} parent=51 // pred_check_branch
          %650 = sbr.rel (%p648) target = $region56
        $region55: #{tpu_custom_call.1} parent=51 // pred_region
          %652 = vsyncadd %s636, 0
          %s653 = smul.addr %s25, 8
          %s654 = scalar_lea.hbm %s8, %s653
          %s656 = sshll.u32 %s639, 4
          %s657 = int_to_ptr.vmem [resolvable:$true] %s656
          %s658 = sshll.u32 %s654, 4
          %s659 = int_to_ptr.hbm [resolvable:$true] %s658
          %661 = dma.vmem_to_hbm [thread:$0]  %s657, 128, %s659, %s636
        $region56: #{tpu_custom_call.1} parent=51 // pred_fallthru
          _
        // Predicated region
        $region57: #{tpu_custom_call.1} parent=51 // pred_check
          %p662 = pneg %p242
        $region58: #{tpu_custom_call.1} parent=51 // pred_check_branch
          %664 = sbr.rel (%p662) target = $region60
        $region59: #{tpu_custom_call.1} parent=51 // pred_region
          _
        $region60: #{tpu_custom_call.1} parent=51 // pred_fallthru
          _
        // Predicated region
        $region61: #{tpu_custom_call.1} parent=51 // pred_check
          %p665 = pneg %p268
        $region62: #{tpu_custom_call.1} parent=51 // pred_check_branch
          %667 = sbr.rel (%p665) target = $region64
        $region63: #{tpu_custom_call.1} parent=51 // pred_region
          _
        $region64: #{tpu_custom_call.1} parent=51 // pred_fallthru
          _
      $region52: #{tpu_custom_call.1} parent=5 // pred_fallthru
        _
      %p668 = scmp.le.s32.totalorder 2, %s20
      // Predicated region
      $region65: #{tpu_custom_call.1} parent=5 // pred_check
        %p669 = pneg %p668
      $region66: #{tpu_custom_call.1} parent=5 // pred_check_branch
        %671 = sbr.rel (%p669) target = $region68
      $region67: #{tpu_custom_call.1} parent=5 // pred_region
        %s672 = ssub.s32 %s20, 2
        // Predicated region
        $region69: #{tpu_custom_call.1} parent=67 // pred_check
          %p673 = pneg %p222
        $region70: #{tpu_custom_call.1} parent=67 // pred_check_branch
          %675 = sbr.rel (%p673) target = $region72
        $region71: #{tpu_custom_call.1} parent=67 // pred_region
          %s676 = sand.u32 %s207, 1
          %s677 = scalar_lea.sflag [#allocation3], %s676
          %s678 = sand.u32 %s207, 1
          %s679 = smul.addr %s678, 8
          %s680 = scalar_lea.vmem [#allocation2], %s679
          %682 = dma.done %s677, 128
        $region72: #{tpu_custom_call.1} parent=67 // pred_fallthru
          _
        // Predicated region
        $region73: #{tpu_custom_call.1} parent=67 // pred_check
          %p683 = pneg %p248
        $region74: #{tpu_custom_call.1} parent=67 // pred_check_branch
          %685 = sbr.rel (%p683) target = $region76
        $region75: #{tpu_custom_call.1} parent=67 // pred_region
          %p686 = scmp.lt.s32.totalorder %s26, 1
          %s687 = scalar_select %p686, %s26, 1
          %s688 = smul.addr %s687, 8
          %s689 = scalar_lea.vmem %s9, %s688
        $region76: #{tpu_custom_call.1} parent=67 // pred_fallthru
          _
        // Predicated region
        $region77: #{tpu_custom_call.1} parent=67 // pred_check
          %p690 = pneg %p274
        $region78: #{tpu_custom_call.1} parent=67 // pred_check_branch
          %692 = sbr.rel (%p690) target = $region80
        $region79: #{tpu_custom_call.1} parent=67 // pred_region
          %p693 = scmp.lt.s32.totalorder %s26, 1
          %s694 = scalar_select %p693, %s26, 1
          %s695 = smul.addr %s694, 8
          %s696 = scalar_lea.vmem %s10, %s695
        $region80: #{tpu_custom_call.1} parent=67 // pred_fallthru
          _
      $region68: #{tpu_custom_call.1} parent=5 // pred_fallthru
        _
    $region6: #{tpu_custom_call.1} parent=1 // loop_footer
      %s24 = sadd.s32 1, %s20
    $region7: #{tpu_custom_call.1} parent=1 // loop_footer_branch
      %19 = sbr.rel target = $region3
    $region8: #{tpu_custom_call.1} parent=1 // loop_exit
      _
    %697 = vsyncpa [#allocation3], 1
    %s698 = scalar_lea.sflag [#allocation3], 1
    %699 = vsyncpa %s698, 1

</llo_original>
